<compile_context>
chip_gen: v5e
topology: v5e:2x2
jax: 0.10.0
libtpu: 0.0.40
codegen_flags: <defaults>
</compile_context>

<pallas_src>
from functools import partial

import jax
import jax.numpy as jnp
from jax.experimental import pallas as pl
from jax.experimental.pallas import tpu as pltpu  # noqa: F401  (TPU backend)


LANES = 128


def _round_up(n, m):
    return ((n + m - 1) // m) * m


def _pad_to(a, shape):
    pads = [(0, t - s) for s, t in zip(a.shape, shape)]
    return jnp.pad(a, pads)


def encoder_kernel(x_ref, w_ir_ref, w_iz_ref, w_in_ref,
                   b_r_ref, b_z_ref, b_in_ref, b_hn_ref,
                   w_fc_ref, b_fc_ref,
                   ht_ref, enc_ref):
    """Single GRU step with zero hidden state + fc head, all lane-dense/padded.

    Shapes (already zero-padded to 128-lane multiples by the wrapper):
      x:     (B, Fp)       w_ir/w_iz/w_in: (Fp, Hp)      biases: (1, Hp)
      w_fc:  (Hp, Fp)      b_fc: (1, Fp)
      outputs: ht (B, Hp), enc (B, Fp)
    Padded lanes of h_new are exactly 0 (tanh(0) == 0), so padding is inert.
    """
    x = x_ref[...]

    r = jax.nn.sigmoid(
        jnp.dot(x, w_ir_ref[...], preferred_element_type=jnp.float32) + b_r_ref[...])
    z = jax.nn.sigmoid(
        jnp.dot(x, w_iz_ref[...], preferred_element_type=jnp.float32) + b_z_ref[...])
    n = jnp.tanh(
        jnp.dot(x, w_in_ref[...], preferred_element_type=jnp.float32)
        + b_in_ref[...] + r * b_hn_ref[...])

    h_new = (1.0 - z) * n                       # h_prev == 0  =>  z * h_prev == 0

    # Ht_trans = relu(oh)
    ht_ref[...] = jnp.maximum(h_new, 0.0)

    # encoder_hidden = relu(fc(Ht))
    enc = jnp.dot(h_new, w_fc_ref[...], preferred_element_type=jnp.float32) + b_fc_ref[...]
    enc_ref[...] = jnp.maximum(enc, 0.0)


@partial(jax.jit, static_argnames=("batch_size", "seq_len", "num_features", "num_hiddens"))
def encoder_forward(x, params, *, batch_size, seq_len, num_features, num_hiddens):
    w_ih, b_ih, w_hh, b_hh, w_fc, b_fc = params
    B, S, F, H = batch_size, seq_len, num_features, num_hiddens
    Fp = _round_up(F, LANES)
    Hp = _round_up(H, LANES)

    # input_data.view(B, S, -1); only the last timestep affects the outputs.
    x_last = x.reshape(B, S, F)[:, S - 1, :].astype(jnp.float32)
    x_pad = _pad_to(x_last, (B, Fp))

    # Split the PyTorch (3H, F) input-weight into per-gate slabs, pre-transpose,
    # and zero-pad to lane-dense (Fp, Hp) tiles.  Gate order is r, z, n.
    w_ih = w_ih.astype(jnp.float32)
    b_ih = b_ih.astype(jnp.float32)
    b_hh = b_hh.astype(jnp.float32)
    w_ir_t = _pad_to(w_ih[0:H].T, (Fp, Hp))
    w_iz_t = _pad_to(w_ih[H:2 * H].T, (Fp, Hp))
    w_in_t = _pad_to(w_ih[2 * H:3 * H].T, (Fp, Hp))

    # With h_prev == 0, gh == b_hh; fold the hh biases for r/z gates host-side.
    b_r = _pad_to((b_ih[0:H] + b_hh[0:H]).reshape(1, H), (1, Hp))
    b_z = _pad_to((b_ih[H:2 * H] + b_hh[H:2 * H]).reshape(1, H), (1, Hp))
    b_in = _pad_to(b_ih[2 * H:3 * H].reshape(1, H), (1, Hp))
    b_hn = _pad_to(b_hh[2 * H:3 * H].reshape(1, H), (1, Hp))

    # fc.weight: (F, H) -> pre-transposed, padded (Hp, Fp).
    w_fc_t = _pad_to(w_fc.astype(jnp.float32).T, (Hp, Fp))
    b_fc_p = _pad_to(b_fc.astype(jnp.float32).reshape(1, F), (1, Fp))

    ht_pad, enc_pad = pl.pallas_call(
        encoder_kernel,
        out_shape=(jax.ShapeDtypeStruct((B, Hp), jnp.float32),
                   jax.ShapeDtypeStruct((B, Fp), jnp.float32)),
    )(x_pad, w_ir_t, w_iz_t, w_in_t, b_r, b_z, b_in, b_hn, w_fc_t, b_fc_p)

    # Match PyTorch return shapes: Ht_trans is (B, 1, H), encoder_hidden is (1, B, F).
    return ht_pad[:, :H].reshape(B, 1, H), enc_pad[:, :F].reshape(1, B, F)


def _reference_forward(x, params, *, batch_size, seq_len, num_features, num_hiddens):
    """Pure-JAX replica of the full PyTorch loop (keeps the dead w_hh path)."""
    w_ih, b_ih, w_hh, b_hh, w_fc, b_fc = params
    B, S, F, H = batch_size, seq_len, num_features, num_hiddens
    x = x.reshape(B, S, F)
    ht_trans = None
    ht = None
    for i in range(S):
        xi = x[:, i, :]
        h0 = jnp.zeros((B, H), jnp.float32)
        gi = xi @ w_ih.T + b_ih
        gh = h0 @ w_hh.T + b_hh
        r = jax.nn.sigmoid(gi[:, :H] + gh[:, :H])
        z = jax.nn.sigmoid(gi[:, H:2 * H] + gh[:, H:2 * H])
        n = jnp.tanh(gi[:, 2 * H:] + r * gh[:, 2 * H:])
        h_new = (1.0 - z) * n + z * h0
        ht_trans = jax.nn.relu(h_new)
        ht = h_new
    enc = jax.nn.relu(ht @ w_fc.T + b_fc)
    return ht_trans.reshape(B, 1, H), enc.reshape(1, B, F)


if __name__ == "__main__":
    batch_size, seq_len, num_features, num_hiddens = 2, 8, 4, 32

    key = jax.random.PRNGKey(0)
    kx, k1, k2, k3, k4, k5, k6 = jax.random.split(key, 7)

    # Deterministic synthetic parameters (PyTorch GRU/Linear shapes).
    w_ih = jax.random.normal(k1, (3 * num_hiddens, num_features), jnp.float32) * 0.1
    b_ih = jax.random.normal(k2, (3 * num_hiddens,), jnp.float32) * 0.1
    w_hh = jax.random.normal(k3, (3 * num_hiddens, num_hiddens), jnp.float32) * 0.1
    b_hh = jax.random.normal(k4, (3 * num_hiddens,), jnp.float32) * 0.1
    w_fc = jax.random.normal(k5, (num_features, num_hiddens), jnp.float32) * 0.1
    b_fc = jax.random.normal(k6, (num_features,), jnp.float32) * 0.1
    params = (w_ih, b_ih, w_hh, b_hh, w_fc, b_fc)

    x = jax.random.normal(kx, (batch_size, seq_len, num_features), jnp.float32)

    ht_trans, enc_hidden = encoder_forward(
        x, params, batch_size=batch_size, seq_len=seq_len,
        num_features=num_features, num_hiddens=num_hiddens)
    jax.block_until_ready((ht_trans, enc_hidden))

    ht_ref, enc_ref = _reference_forward(
        x, params, batch_size=batch_size, seq_len=seq_len,
        num_features=num_features, num_hiddens=num_hiddens)

    assert ht_trans.shape == (batch_size, 1, num_hiddens)
    assert enc_hidden.shape == (1, batch_size, num_features)
    assert jnp.allclose(ht_trans, ht_ref, atol=1e-5)
    assert jnp.allclose(enc_hidden, enc_ref, atol=1e-5)

    print("KERNEL_OK")
</pallas_src>

<mosaic_0001>
module attributes {stable_mosaic.version = 11 : i64} {
  func.func @encoder_kernel(%arg0: memref<2x128xf32, #tpu.memory_space<vmem>>, %arg1: memref<128x128xf32, #tpu.memory_space<vmem>>, %arg2: memref<128x128xf32, #tpu.memory_space<vmem>>, %arg3: memref<128x128xf32, #tpu.memory_space<vmem>>, %arg4: memref<1x128xf32, #tpu.memory_space<vmem>>, %arg5: memref<1x128xf32, #tpu.memory_space<vmem>>, %arg6: memref<1x128xf32, #tpu.memory_space<vmem>>, %arg7: memref<1x128xf32, #tpu.memory_space<vmem>>, %arg8: memref<128x128xf32, #tpu.memory_space<vmem>>, %arg9: memref<1x128xf32, #tpu.memory_space<vmem>>, %arg10: memref<2x128xf32, #tpu.memory_space<vmem>>, %arg11: memref<2x128xf32, #tpu.memory_space<vmem>>) attributes {dimension_semantics = [], scalar_prefetch = 0 : i64, scratch_operands = 0 : i64, tpu.core_type = #tpu.core_type<tc>} {
    %c0 = arith.constant 0 : index
    %c0_0 = arith.constant 0 : index
    %0 = vector.load %arg0[%c0, %c0_0] : memref<2x128xf32, #tpu.memory_space<vmem>>, vector<2x128xf32>
    %c0_1 = arith.constant 0 : index
    %c0_2 = arith.constant 0 : index
    %1 = vector.load %arg1[%c0_1, %c0_2] : memref<128x128xf32, #tpu.memory_space<vmem>>, vector<128x128xf32>
    %cst = arith.constant dense<0.000000e+00> : vector<2x128xf32>
    %2 = tpu.matmul %0, %1, %cst {dimension_numbers = #tpu.dot_dimension_numbers<[1], [0], [0], [1], [0, 0, 1, 1], [], []>} : vector<2x128xf32>, vector<128x128xf32>, vector<2x128xf32> -> vector<2x128xf32>
    %c0_3 = arith.constant 0 : index
    %c0_4 = arith.constant 0 : index
    %3 = vector.load %arg4[%c0_3, %c0_4] : memref<1x128xf32, #tpu.memory_space<vmem>>, vector<1x128xf32>
    %4 = vector.broadcast %3 : vector<1x128xf32> to vector<2x128xf32>
    %5 = arith.addf %2, %4 : vector<2x128xf32>
    %6 = arith.negf %5 : vector<2x128xf32>
    %7 = math.exp %6 : vector<2x128xf32>
    %cst_5 = arith.constant 1.000000e+00 : f32
    %8 = vector.broadcast %cst_5 : f32 to vector<2x128xf32>
    %9 = arith.addf %8, %7 : vector<2x128xf32>
    %10 = arith.divf %8, %9 : vector<2x128xf32>
    %c0_6 = arith.constant 0 : index
    %c0_7 = arith.constant 0 : index
    %11 = vector.load %arg2[%c0_6, %c0_7] : memref<128x128xf32, #tpu.memory_space<vmem>>, vector<128x128xf32>
    %cst_8 = arith.constant dense<0.000000e+00> : vector<2x128xf32>
    %12 = tpu.matmul %0, %11, %cst_8 {dimension_numbers = #tpu.dot_dimension_numbers<[1], [0], [0], [1], [0, 0, 1, 1], [], []>} : vector<2x128xf32>, vector<128x128xf32>, vector<2x128xf32> -> vector<2x128xf32>
    %c0_9 = arith.constant 0 : index
    %c0_10 = arith.constant 0 : index
    %13 = vector.load %arg5[%c0_9, %c0_10] : memref<1x128xf32, #tpu.memory_space<vmem>>, vector<1x128xf32>
    %14 = vector.broadcast %13 : vector<1x128xf32> to vector<2x128xf32>
    %15 = arith.addf %12, %14 : vector<2x128xf32>
    %16 = arith.negf %15 : vector<2x128xf32>
    %17 = math.exp %16 : vector<2x128xf32>
    %cst_11 = arith.constant 1.000000e+00 : f32
    %18 = vector.broadcast %cst_11 : f32 to vector<2x128xf32>
    %19 = arith.addf %18, %17 : vector<2x128xf32>
    %20 = arith.divf %18, %19 : vector<2x128xf32>
    %c0_12 = arith.constant 0 : index
    %c0_13 = arith.constant 0 : index
    %21 = vector.load %arg3[%c0_12, %c0_13] : memref<128x128xf32, #tpu.memory_space<vmem>>, vector<128x128xf32>
    %cst_14 = arith.constant dense<0.000000e+00> : vector<2x128xf32>
    %22 = tpu.matmul %0, %21, %cst_14 {dimension_numbers = #tpu.dot_dimension_numbers<[1], [0], [0], [1], [0, 0, 1, 1], [], []>} : vector<2x128xf32>, vector<128x128xf32>, vector<2x128xf32> -> vector<2x128xf32>
    %c0_15 = arith.constant 0 : index
    %c0_16 = arith.constant 0 : index
    %23 = vector.load %arg6[%c0_15, %c0_16] : memref<1x128xf32, #tpu.memory_space<vmem>>, vector<1x128xf32>
    %24 = vector.broadcast %23 : vector<1x128xf32> to vector<2x128xf32>
    %25 = arith.addf %22, %24 : vector<2x128xf32>
    %c0_17 = arith.constant 0 : index
    %c0_18 = arith.constant 0 : index
    %26 = vector.load %arg7[%c0_17, %c0_18] : memref<1x128xf32, #tpu.memory_space<vmem>>, vector<1x128xf32>
    %27 = vector.broadcast %26 : vector<1x128xf32> to vector<2x128xf32>
    %28 = arith.mulf %10, %27 : vector<2x128xf32>
    %29 = arith.addf %25, %28 : vector<2x128xf32>
    %30 = math.tanh %29 : vector<2x128xf32>
    %cst_19 = arith.constant 1.000000e+00 : f32
    %31 = vector.broadcast %cst_19 : f32 to vector<2x128xf32>
    %32 = arith.subf %31, %20 : vector<2x128xf32>
    %33 = arith.mulf %32, %30 : vector<2x128xf32>
    %cst_20 = arith.constant 0.000000e+00 : f32
    %34 = vector.broadcast %cst_20 : f32 to vector<2x128xf32>
    %35 = arith.maximumf %33, %34 : vector<2x128xf32>
    %c0_21 = arith.constant 0 : index
    %c0_22 = arith.constant 0 : index
    %36 = vector.load %arg10[%c0_21, %c0_22] : memref<2x128xf32, #tpu.memory_space<vmem>>, vector<2x128xf32>
    tpu.vector_store %arg10[%c0_21, %c0_22], %35 {strides = array<i32>} : memref<2x128xf32, #tpu.memory_space<vmem>>, vector<2x128xf32>,
    %c0_23 = arith.constant 0 : index
    %c0_24 = arith.constant 0 : index
    %37 = vector.load %arg8[%c0_23, %c0_24] : memref<128x128xf32, #tpu.memory_space<vmem>>, vector<128x128xf32>
    %cst_25 = arith.constant dense<0.000000e+00> : vector<2x128xf32>
    %38 = tpu.matmul %33, %37, %cst_25 {dimension_numbers = #tpu.dot_dimension_numbers<[1], [0], [0], [1], [0, 0, 1, 1], [], []>} : vector<2x128xf32>, vector<128x128xf32>, vector<2x128xf32> -> vector<2x128xf32>
    %c0_26 = arith.constant 0 : index
    %c0_27 = arith.constant 0 : index
    %39 = vector.load %arg9[%c0_26, %c0_27] : memref<1x128xf32, #tpu.memory_space<vmem>>, vector<1x128xf32>
    %40 = vector.broadcast %39 : vector<1x128xf32> to vector<2x128xf32>
    %41 = arith.addf %38, %40 : vector<2x128xf32>
    %cst_28 = arith.constant 0.000000e+00 : f32
    %42 = vector.broadcast %cst_28 : f32 to vector<2x128xf32>
    %43 = arith.maximumf %41, %42 : vector<2x128xf32>
    %c0_29 = arith.constant 0 : index
    %c0_30 = arith.constant 0 : index
    %44 = vector.load %arg11[%c0_29, %c0_30] : memref<2x128xf32, #tpu.memory_space<vmem>>, vector<2x128xf32>
    tpu.vector_store %arg11[%c0_29, %c0_30], %43 {strides = array<i32>} : memref<2x128xf32, #tpu.memory_space<vmem>>, vector<2x128xf32>,
    return
  }
}

</mosaic_0001>

<llo_original>
// kernel: encoder_forward.1
$region0: #{encoder_forward.1}
  #allocation0 [shape = 'u32[]', space=smem, size = 0x4, offset = 0x4, fixed_abs, tag = 'smem constant byte address 0x4 - core index']
  #allocation1 [shape = 'u32[72,128]{1,0:T(1,128)}', space=vmem, size = 0x9000, scoped, tag = 'internal scratch']
  %s0 = inlined_call_operand.vmem [shape: f32[2,128], index: 0, kind: input, shape index: {}]
  %s1 = inlined_call_operand.vmem [shape: f32[128,128], index: 1, kind: input, shape index: {}]
  %s2 = inlined_call_operand.vmem [shape: f32[128,128], index: 2, kind: input, shape index: {}]
  %s3 = inlined_call_operand.vmem [shape: f32[128,128], index: 3, kind: input, shape index: {}]
  %s4 = inlined_call_operand.vmem [shape: f32[1,128], index: 4, kind: input, shape index: {}]
  %s5 = inlined_call_operand.vmem [shape: f32[1,128], index: 5, kind: input, shape index: {}]
  %s6 = inlined_call_operand.vmem [shape: f32[1,128], index: 6, kind: input, shape index: {}]
  %s7 = inlined_call_operand.vmem [shape: f32[1,128], index: 7, kind: input, shape index: {}]
  %s8 = inlined_call_operand.vmem [shape: f32[128,128], index: 8, kind: input, shape index: {}]
  %s9 = inlined_call_operand.vmem [shape: f32[1,128], index: 9, kind: input, shape index: {}]
  %s10 = inlined_call_operand.hbm [shape: f32[2,128], index: 10, kind: output, shape index: {0}]
  %s11 = inlined_call_operand.vmem [shape: f32[2,128], index: 11, kind: output, shape index: {1}]
  %12 = xla_tuple %s10, %s11
  %s13 = sld [smem:[#allocation0]]
  $region58: #{encoder_forward.1} parent=0
    _
  %s15 = ssub.s32 1, %s13
  %s16 = scalar_select 0, %s15, %s13
  $region1: #{encoder_forward.1} parent=0
    #allocation2 [shape = 'u8[1024]{0}', space=vmem, size = 0x400, scoped, tag = 'output window, operand 0, single buffered']
    #allocation3 [shape = 's32[1]{0}', space=sflag, size = 0x4, scoped, tag = 'scoped memory for encoder_forward.1']
    %17 = vsyncpa [#allocation3], 0
    // Predicated region
    $region2: #{encoder_forward.1} parent=1 // pred_check
      _
    $region3: #{encoder_forward.1} parent=1 // pred_check_branch
      %19 = sbr.rel (0) target = $region5
    $region4: #{encoder_forward.1} parent=1 // pred_region
      _
    $region5: #{encoder_forward.1} parent=1 // pred_fallthru
      _
    // Predicated region
    $region6: #{encoder_forward.1} parent=1 // pred_check
      _
    $region7: #{encoder_forward.1} parent=1 // pred_check_branch
      %21 = sbr.rel (0) target = $region9
    $region8: #{encoder_forward.1} parent=1 // pred_region
      _
    $region9: #{encoder_forward.1} parent=1 // pred_fallthru
      _
    // Predicated region
    $region10: #{encoder_forward.1} parent=1 // pred_check
      _
    $region11: #{encoder_forward.1} parent=1 // pred_check_branch
      %23 = sbr.rel (0) target = $region13
    $region12: #{encoder_forward.1} parent=1 // pred_region
      _
    $region13: #{encoder_forward.1} parent=1 // pred_fallthru
      _
    // Predicated region
    $region14: #{encoder_forward.1} parent=1 // pred_check
      _
    $region15: #{encoder_forward.1} parent=1 // pred_check_branch
      %25 = sbr.rel (0) target = $region17
    $region16: #{encoder_forward.1} parent=1 // pred_region
      _
    $region17: #{encoder_forward.1} parent=1 // pred_fallthru
      _
    // Predicated region
    $region18: #{encoder_forward.1} parent=1 // pred_check
      _
    $region19: #{encoder_forward.1} parent=1 // pred_check_branch
      %27 = sbr.rel (0) target = $region21
    $region20: #{encoder_forward.1} parent=1 // pred_region
      _
    $region21: #{encoder_forward.1} parent=1 // pred_fallthru
      _
    // Predicated region
    $region22: #{encoder_forward.1} parent=1 // pred_check
      _
    $region23: #{encoder_forward.1} parent=1 // pred_check_branch
      %29 = sbr.rel (0) target = $region25
    $region24: #{encoder_forward.1} parent=1 // pred_region
      _
    $region25: #{encoder_forward.1} parent=1 // pred_fallthru
      _
    // Predicated region
    $region26: #{encoder_forward.1} parent=1 // pred_check
      _
    $region27: #{encoder_forward.1} parent=1 // pred_check_branch
      %31 = sbr.rel (0) target = $region29
    $region28: #{encoder_forward.1} parent=1 // pred_region
      _
    $region29: #{encoder_forward.1} parent=1 // pred_fallthru
      _
    // Predicated region
    $region30: #{encoder_forward.1} parent=1 // pred_check
      _
    $region31: #{encoder_forward.1} parent=1 // pred_check_branch
      %33 = sbr.rel (0) target = $region33
    $region32: #{encoder_forward.1} parent=1 // pred_region
      _
    $region33: #{encoder_forward.1} parent=1 // pred_fallthru
      _
    // Predicated region
    $region34: #{encoder_forward.1} parent=1 // pred_check
      _
    $region35: #{encoder_forward.1} parent=1 // pred_check_branch
      %35 = sbr.rel (0) target = $region37
    $region36: #{encoder_forward.1} parent=1 // pred_region
      _
    $region37: #{encoder_forward.1} parent=1 // pred_fallthru
      _
    // Predicated region
    $region38: #{encoder_forward.1} parent=1 // pred_check
      _
    $region39: #{encoder_forward.1} parent=1 // pred_check_branch
      %37 = sbr.rel (0) target = $region41
    $region40: #{encoder_forward.1} parent=1 // pred_region
      _
    $region41: #{encoder_forward.1} parent=1 // pred_fallthru
      _
    %v38 = vld [vmem:[%s0] sm:$0x3]
    %v39 = vld [vmem:[%s1] sm:$0xff]
    %v40 = vld [vmem:[%s1 + $0x8] sm:$0xff]
    %v41 = vld [vmem:[%s1 + $0x10] sm:$0xff]
    %v42 = vld [vmem:[%s1 + $0x18] sm:$0xff]
    %v43 = vld [vmem:[%s1 + $0x20] sm:$0xff]
    %v44 = vld [vmem:[%s1 + $0x28] sm:$0xff]
    %v45 = vld [vmem:[%s1 + $0x30] sm:$0xff]
    %v46 = vld [vmem:[%s1 + $0x38] sm:$0xff]
    %v47 = vld [vmem:[%s1 + $0x40] sm:$0xff]
    %v48 = vld [vmem:[%s1 + $0x48] sm:$0xff]
    %v49 = vld [vmem:[%s1 + $0x50] sm:$0xff]
    %v50 = vld [vmem:[%s1 + $0x58] sm:$0xff]
    %v51 = vld [vmem:[%s1 + $0x60] sm:$0xff]
    %v52 = vld [vmem:[%s1 + $0x68] sm:$0xff]
    %v53 = vld [vmem:[%s1 + $0x70] sm:$0xff]
    %v54 = vld [vmem:[%s1 + $0x78] sm:$0xff]
    %v55 = vld [vmem:[%s4] sm:$0x1]
    %v57 = vperm.slane %v55, 0
    %59 = vmatpush.msra.mxu0 %v54
    %60 = vmatpush.msra.mxu0 %v53
    %61 = vmatpush.msra.mxu0 %v52
    %62 = vmatpush.msra.mxu0 %v51
    %63 = vmatpush.msra.mxu0 %v50
    %64 = vmatpush.msra.mxu0 %v49
    %65 = vmatpush.msra.mxu0 %v48
    %66 = vmatpush.msra.mxu0 %v47
    %67 = vmatpush.msra.mxu0 %v46
    %68 = vmatpush.msra.mxu0 %v45
    %69 = vmatpush.msra.mxu0 %v44
    %70 = vmatpush.msra.mxu0 %v43
    %71 = vmatpush.msra.mxu0 %v42
    %72 = vmatpush.msra.mxu0 %v41
    %73 = vmatpush.msra.mxu0 %v40
    %74 = vmatpush.msra.mxu0 %v39
    %75 = vmatmul.f32.gmra.mxu0 %v38
    %v76 = vpop.f32.mrf.mxu0
    %v77 = vadd.f32 %v57, %v76
    %78 = vdwg.mxu0
    %v79 = vxor.u32 %v77, 2147483648
    %v80 = vmul.f32 %v79, 1.442695
    %v81 = vpow.pop %v80
    %v82 = vadd.f32 %v81, 1.0
    %v83 = vrcp.pop %v82
    %v84 = vmul.f32 %v82, %v83
    %v85 = vsub.f32 1.0, %v84
    %v86 = vmul.f32 %v83, %v85
    %v87 = vadd.f32 %v83, %v86
    %vm88 = vweird.f32 %v82
    %vm89 = vweird.f32 %v83
    %vm90 = vmor %vm88, %vm89
    %v91 = vsel %vm90, %v83, %v87
    %v92 = vand.u32 2147483647, %v82
    %vm93 = vcmp.eq.f32.partialorder %v92, 8.507059e+37
    %v94 = vand.u32 %v82, 2147483648
    %v95 = vor.u32 1.1754944e-38, %v94
    %v96 = vsel %vm93, %v95, %v91
    %v97 = vmul.f32 1.0, %v96
    %v98 = vld [vmem:[%s2] sm:$0xff]
    %v99 = vld [vmem:[%s2 + $0x8] sm:$0xff]
    %v100 = vld [vmem:[%s2 + $0x10] sm:$0xff]
    %v101 = vld [vmem:[%s2 + $0x18] sm:$0xff]
    %v102 = vld [vmem:[%s2 + $0x20] sm:$0xff]
    %v103 = vld [vmem:[%s2 + $0x28] sm:$0xff]
    %v104 = vld [vmem:[%s2 + $0x30] sm:$0xff]
    %v105 = vld [vmem:[%s2 + $0x38] sm:$0xff]
    %v106 = vld [vmem:[%s2 + $0x40] sm:$0xff]
    %v107 = vld [vmem:[%s2 + $0x48] sm:$0xff]
    %v108 = vld [vmem:[%s2 + $0x50] sm:$0xff]
    %v109 = vld [vmem:[%s2 + $0x58] sm:$0xff]
    %v110 = vld [vmem:[%s2 + $0x60] sm:$0xff]
    %v111 = vld [vmem:[%s2 + $0x68] sm:$0xff]
    %v112 = vld [vmem:[%s2 + $0x70] sm:$0xff]
    %v113 = vld [vmem:[%s2 + $0x78] sm:$0xff]
    %v114 = vld [vmem:[%s5] sm:$0x1]
    %v116 = vperm.slane %v114, 0
    %118 = vmatpush.msra.mxu0 %v113
    %119 = vmatpush.msra.mxu0 %v112
    %120 = vmatpush.msra.mxu0 %v111
    %121 = vmatpush.msra.mxu0 %v110
    %122 = vmatpush.msra.mxu0 %v109
    %123 = vmatpush.msra.mxu0 %v108
    %124 = vmatpush.msra.mxu0 %v107
    %125 = vmatpush.msra.mxu0 %v106
    %126 = vmatpush.msra.mxu0 %v105
    %127 = vmatpush.msra.mxu0 %v104
    %128 = vmatpush.msra.mxu0 %v103
    %129 = vmatpush.msra.mxu0 %v102
    %130 = vmatpush.msra.mxu0 %v101
    %131 = vmatpush.msra.mxu0 %v100
    %132 = vmatpush.msra.mxu0 %v99
    %133 = vmatpush.msra.mxu0 %v98
    %134 = vmatmul.f32.gmra.mxu0 %v38
    %v135 = vpop.f32.mrf.mxu0
    %v136 = vadd.f32 %v116, %v135
    %137 = vdwg.mxu0
    %v138 = vxor.u32 %v136, 2147483648
    %v139 = vmul.f32 %v138, 1.442695
    %v140 = vpow.pop %v139
    %v141 = vadd.f32 %v140, 1.0
    %v142 = vrcp.pop %v141
    %v143 = vmul.f32 %v141, %v142
    %v144 = vsub.f32 1.0, %v143
    %v145 = vmul.f32 %v142, %v144
    %v146 = vadd.f32 %v142, %v145
    %vm147 = vweird.f32 %v141
    %vm148 = vweird.f32 %v142
    %vm149 = vmor %vm147, %vm148
    %v150 = vsel %vm149, %v142, %v146
    %v151 = vand.u32 2147483647, %v141
    %vm152 = vcmp.eq.f32.partialorder %v151, 8.507059e+37
    %v153 = vand.u32 %v141, 2147483648
    %v154 = vor.u32 1.1754944e-38, %v153
    %v155 = vsel %vm152, %v154, %v150
    %v156 = vmul.f32 1.0, %v155
    %v157 = vld [vmem:[%s3] sm:$0xff]
    %v158 = vld [vmem:[%s3 + $0x8] sm:$0xff]
    %v159 = vld [vmem:[%s3 + $0x10] sm:$0xff]
    %v160 = vld [vmem:[%s3 + $0x18] sm:$0xff]
    %v161 = vld [vmem:[%s3 + $0x20] sm:$0xff]
    %v162 = vld [vmem:[%s3 + $0x28] sm:$0xff]
    %v163 = vld [vmem:[%s3 + $0x30] sm:$0xff]
    %v164 = vld [vmem:[%s3 + $0x38] sm:$0xff]
    %v165 = vld [vmem:[%s3 + $0x40] sm:$0xff]
    %v166 = vld [vmem:[%s3 + $0x48] sm:$0xff]
    %v167 = vld [vmem:[%s3 + $0x50] sm:$0xff]
    %v168 = vld [vmem:[%s3 + $0x58] sm:$0xff]
    %v169 = vld [vmem:[%s3 + $0x60] sm:$0xff]
    %v170 = vld [vmem:[%s3 + $0x68] sm:$0xff]
    %v171 = vld [vmem:[%s3 + $0x70] sm:$0xff]
    %v172 = vld [vmem:[%s3 + $0x78] sm:$0xff]
    %v173 = vld [vmem:[%s6] sm:$0x1]
    %v175 = vperm.slane %v173, 0
    %177 = vmatpush.msra.mxu0 %v172
    %178 = vmatpush.msra.mxu0 %v171
    %179 = vmatpush.msra.mxu0 %v170
    %180 = vmatpush.msra.mxu0 %v169
    %181 = vmatpush.msra.mxu0 %v168
    %182 = vmatpush.msra.mxu0 %v167
    %183 = vmatpush.msra.mxu0 %v166
    %184 = vmatpush.msra.mxu0 %v165
    %185 = vmatpush.msra.mxu0 %v164
    %186 = vmatpush.msra.mxu0 %v163
    %187 = vmatpush.msra.mxu0 %v162
    %188 = vmatpush.msra.mxu0 %v161
    %189 = vmatpush.msra.mxu0 %v160
    %190 = vmatpush.msra.mxu0 %v159
    %191 = vmatpush.msra.mxu0 %v158
    %192 = vmatpush.msra.mxu0 %v157
    %193 = vmatmul.f32.gmra.mxu0 %v38
    %v194 = vpop.f32.mrf.mxu0
    %v195 = vadd.f32 %v175, %v194
    %196 = vdwg.mxu0
    %v197 = vld [vmem:[%s7] sm:$0x1]
    %v199 = vperm.slane %v197, 0
    %v201 = vmul.f32 %v97, %v199
    %v202 = vadd.f32 %v195, %v201
    %v203 = vtanh.pop %v202
    %v204 = vsub.f32 1.0, %v156
    %v205 = vmul.f32 %v204, %v203
    %v206 = vmax.f32 %v205, 0.0
    %207 = vst [vmem:[#allocation2] sm:$0x3] %v206
    %v208 = vld [vmem:[%s8] sm:$0xff]
    %v209 = vld [vmem:[%s8 + $0x8] sm:$0xff]
    %v210 = vld [vmem:[%s8 + $0x10] sm:$0xff]
    %v211 = vld [vmem:[%s8 + $0x18] sm:$0xff]
    %v212 = vld [vmem:[%s8 + $0x20] sm:$0xff]
    %v213 = vld [vmem:[%s8 + $0x28] sm:$0xff]
    %v214 = vld [vmem:[%s8 + $0x30] sm:$0xff]
    %v215 = vld [vmem:[%s8 + $0x38] sm:$0xff]
    %v216 = vld [vmem:[%s8 + $0x40] sm:$0xff]
    %v217 = vld [vmem:[%s8 + $0x48] sm:$0xff]
    %v218 = vld [vmem:[%s8 + $0x50] sm:$0xff]
    %v219 = vld [vmem:[%s8 + $0x58] sm:$0xff]
    %v220 = vld [vmem:[%s8 + $0x60] sm:$0xff]
    %v221 = vld [vmem:[%s8 + $0x68] sm:$0xff]
    %v222 = vld [vmem:[%s8 + $0x70] sm:$0xff]
    %v223 = vld [vmem:[%s8 + $0x78] sm:$0xff]
    %v224 = vld [vmem:[%s9] sm:$0x1]
    %v226 = vperm.slane %v224, 0
    %228 = vmatpush.msra.mxu0 %v223
    %229 = vmatpush.msra.mxu0 %v222
    %230 = vmatpush.msra.mxu0 %v221
    %231 = vmatpush.msra.mxu0 %v220
    %232 = vmatpush.msra.mxu0 %v219
    %233 = vmatpush.msra.mxu0 %v218
    %234 = vmatpush.msra.mxu0 %v217
    %235 = vmatpush.msra.mxu0 %v216
    %236 = vmatpush.msra.mxu0 %v215
    %237 = vmatpush.msra.mxu0 %v214
    %238 = vmatpush.msra.mxu0 %v213
    %239 = vmatpush.msra.mxu0 %v212
    %240 = vmatpush.msra.mxu0 %v211
    %241 = vmatpush.msra.mxu0 %v210
    %242 = vmatpush.msra.mxu0 %v209
    %243 = vmatpush.msra.mxu0 %v208
    %244 = vmatmul.f32.gmra.mxu0 %v205
    %v245 = vpop.f32.mrf.mxu0
    %v246 = vadd.f32 %v226, %v245
    %247 = vdwg.mxu0
    %v248 = vmax.f32 %v246, 0.0
    %249 = vst [vmem:[%s11] sm:$0x3] %v248
    // Predicated region
    $region42: #{encoder_forward.1} parent=1 // pred_check
      _
    $region43: #{encoder_forward.1} parent=1 // pred_check_branch
      %251 = sbr.rel (0) target = $region45
    $region44: #{encoder_forward.1} parent=1 // pred_region
      %253 = vsyncadd [#allocation3], 0
      %s255 = sshll.u32 [#allocation2], 4
      %s256 = int_to_ptr.vmem [resolvable:$true] %s255
      %s257 = sshll.u32 %s10, 4
      %s258 = int_to_ptr.hbm [resolvable:$true] %s257
      %260 = dma.vmem_to_hbm [thread:$0]  %s256, 32, %s258, [#allocation3]
    $region45: #{encoder_forward.1} parent=1 // pred_fallthru
      _
    // Predicated region
    $region46: #{encoder_forward.1} parent=1 // pred_check
      _
    $region47: #{encoder_forward.1} parent=1 // pred_check_branch
      %262 = sbr.rel (0) target = $region49
    $region48: #{encoder_forward.1} parent=1 // pred_region
      _
    $region49: #{encoder_forward.1} parent=1 // pred_fallthru
      _
    // Predicated region
    $region50: #{encoder_forward.1} parent=1 // pred_check
      _
    $region51: #{encoder_forward.1} parent=1 // pred_check_branch
      %264 = sbr.rel (0) target = $region53
    $region52: #{encoder_forward.1} parent=1 // pred_region
      %266 = dma.done [#allocation3], 32
    $region53: #{encoder_forward.1} parent=1 // pred_fallthru
      _
    // Predicated region
    $region54: #{encoder_forward.1} parent=1 // pred_check
      _
    $region55: #{encoder_forward.1} parent=1 // pred_check_branch
      %268 = sbr.rel (0) target = $region57
    $region56: #{encoder_forward.1} parent=1 // pred_region
      _
    $region57: #{encoder_forward.1} parent=1 // pred_fallthru
      _
    %269 = vsyncpa [#allocation3], 1

</llo_original>
